<compile_context>
chip_gen: v7x
topology: tpu7x:2x2x1
jax: 0.10.0
libtpu: 0.0.40
codegen_flags: <defaults>
</compile_context>

<pallas_src>
import functools

import jax
import jax.numpy as jnp
from jax.experimental import pallas as pl
from jax.experimental.pallas import tpu as pltpu

BN_EPS = 1e-5


def _mlp_layer_kernel(x_ref, w_ref, g_ref, beta_ref, *rest, short_cut):
    # x_ref:    (B, tile_k)       input slice along K
    # w_ref:    (tile_n, tile_k)  weight tile (nn.Linear layout: out x in)
    # g_ref, beta_ref: (1, tile_n) BatchNorm affine params
    # [x_res_ref: (B, tile_n)]    residual tile, only present when short_cut
    # o_ref:    (B, tile_n)       output tile (resident across the K axis)
    # acc_ref:  (B, tile_n) f32   accumulator scratch
    if short_cut:
        x_res_ref, o_ref, acc_ref = rest
    else:
        o_ref, acc_ref = rest

    k = pl.program_id(1)

    @pl.when(k == 0)
    def _():
        acc_ref[...] = jnp.zeros_like(acc_ref)

    # Partial Linear product: (B, tk) x (tn, tk) -> (B, tn), NT contraction,
    # feeds the MXU directly (no transpose relayout). Bias intentionally omitted:
    # it cancels exactly under the batch-mean subtraction of training-mode BN.
    acc_ref[...] += jax.lax.dot_general(
        x_ref[...], w_ref[...],
        dimension_numbers=(((1,), (1,)), ((), ())),
        preferred_element_type=jnp.float32)

    @pl.when(k == pl.num_programs(1) - 1)
    def _():
        h = acc_ref[...]                               # (B, tile_n) f32
        inv_b = 1.0 / h.shape[0]
        # One-pass batch moments (biased variance, matching BatchNorm1d training mode).
        mean = jnp.sum(h, axis=0, keepdims=True) * inv_b
        msq = jnp.sum(h * h, axis=0, keepdims=True) * inv_b
        var = jnp.maximum(msq - mean * mean, 0.0)
        y = (h - mean) * jax.lax.rsqrt(var + BN_EPS) * g_ref[...] + beta_ref[...]
        y = jnp.maximum(y, 0.0)                        # ReLU
        if short_cut:
            y = y + x_res_ref[...]
        o_ref[...] = y


def _pick_tile_n(N, max_tile=512):
    """Largest lane-dense tile (multiple of 128, <= max_tile) that keeps >=2 N-blocks."""
    best = None
    t = 128
    while t <= min(max_tile, N):
        if N % t == 0 and N // t >= 2:
            best = t
        t += 128
    return best if best is not None else N


def _pick_tile_k(K, max_tile=512):
    if K % 128 != 0:
        return K                       # single full-K block (BlockSpec full-dim exception)
    best = 128
    t = 128
    while t <= min(max_tile, K):
        if K % t == 0:
            best = t
        t += 128
    return best


def mlp_layer_forward(x, w, b, gamma, beta, *, short_cut=True, tile_n=None, tile_k=None):
    """Pallas implementation of MLPLayer.forward.

    x: (B, in_features) f32; w: (out_features, in_features) f32 (nn.Linear layout)
    b: (out_features,) f32 -- accepted for API parity but never read: training-mode
       BatchNorm cancels a per-feature constant bias exactly.
    gamma, beta: (out_features,) f32 BatchNorm affine parameters.
    """
    del b  # cancelled by BN mean subtraction; skipping it saves a DMA stream + VPU add
    B, K = x.shape
    N, Kw = w.shape
    assert Kw == K, "weight in_features mismatch"
    short_cut = bool(short_cut) and (K == N)

    assert N % 128 == 0, "out_features must be a multiple of 128 (lane alignment)"
    if tile_n is None:
        tile_n = _pick_tile_n(N)
    assert tile_n % 128 == 0 and N % tile_n == 0, "tile_n must be a 128-multiple dividing N"
    if tile_k is None:
        tile_k = _pick_tile_k(K)
    assert tile_k == K or (tile_k % 128 == 0 and K % tile_k == 0), \
        "tile_k must equal K or be a 128-multiple dividing K"

    g2 = gamma.reshape(1, N)
    beta2 = beta.reshape(1, N)

    grid = (N // tile_n, K // tile_k)   # reduction (K) axis last

    in_specs = [
        pl.BlockSpec((B, tile_k), lambda j, kk: (0, kk)),        # x slice along K
        pl.BlockSpec((tile_n, tile_k), lambda j, kk: (j, kk)),   # weight tile
        pl.BlockSpec((1, tile_n), lambda j, kk: (0, j)),         # gamma
        pl.BlockSpec((1, tile_n), lambda j, kk: (0, j)),         # beta
    ]
    inputs = [x, w, g2, beta2]
    if short_cut:
        in_specs.append(pl.BlockSpec((B, tile_n), lambda j, kk: (0, j)))  # residual tile
        inputs.append(x)

    # VMEM footprint (double-buffered inputs + resident output + accumulator), f32.
    footprint = 4 * (
        2 * B * tile_k                      # x slice
        + 2 * tile_n * tile_k               # weight tile
        + 4 * tile_n                        # gamma/beta
        + (2 * B * tile_n if short_cut else 0)
        + 2 * B * tile_n                    # output
        + B * tile_n                        # accumulator scratch
    )
    vmem_limit = int(min(max(3 * footprint, 16 * 2**20), 64 * 2**20))

    kernel = functools.partial(_mlp_layer_kernel, short_cut=short_cut)

    out = pl.pallas_call(
        kernel,
        out_shape=jax.ShapeDtypeStruct((B, N), jnp.float32),
        grid_spec=pltpu.PrefetchScalarGridSpec(
            num_scalar_prefetch=0,
            grid=grid,
            in_specs=in_specs,
            out_specs=pl.BlockSpec((B, tile_n), lambda j, kk: (0, j)),
            scratch_shapes=[pltpu.VMEM((B, tile_n), jnp.float32)],
        ),
        compiler_params=pltpu.CompilerParams(
            dimension_semantics=("parallel", "arbitrary"),
            vmem_limit_bytes=vmem_limit),
        cost_estimate=pl.CostEstimate(
            flops=2 * B * K * N,
            transcendentals=N,
            bytes_accessed=4 * (N * K + B * K + 2 * B * N + 2 * N)),
    )(*inputs)
    return out


def _reference(x, w, b, gamma, beta, short_cut):
    # Faithful PyTorch semantics: Linear WITH bias, then training-mode BN, ReLU, residual.
    h = x @ w.T + b[None, :]
    mean = jnp.mean(h, axis=0, keepdims=True)
    var = jnp.mean((h - mean) ** 2, axis=0, keepdims=True)
    y = (h - mean) / jnp.sqrt(var + BN_EPS) * gamma[None, :] + beta[None, :]
    y = jnp.maximum(y, 0.0)
    if short_cut and x.shape[1] == w.shape[0]:
        y = x + y
    return y


# TODO(synk): BatchNorm1d running_mean/running_var buffer updates (training-mode side
# effect) are not emitted; they do not affect the forward output.

if __name__ == "__main__":
    key = jax.random.PRNGKey(0)

    def make_params(k, in_f, out_f):
        kw, kb = jax.random.split(k)
        bound = 1.0 / jnp.sqrt(jnp.float32(in_f))
        w = jax.random.uniform(kw, (out_f, in_f), minval=-bound, maxval=bound,
                               dtype=jnp.float32)
        b = jax.random.uniform(kb, (out_f,), minval=-bound, maxval=bound,
                               dtype=jnp.float32)
        gamma = jnp.ones((out_f,), dtype=jnp.float32)
        beta = jnp.zeros((out_f,), dtype=jnp.float32)
        return w, b, gamma, beta

    # Case 1: in == out -> residual shortcut active; tile_k=128 exercises the K accumulator.
    B, in_f, out_f = 8, 256, 256
    k1, k2, k3 = jax.random.split(key, 3)
    x1 = jax.random.normal(k1, (B, in_f), dtype=jnp.float32)
    w1, b1, g1, be1 = make_params(k2, in_f, out_f)
    y1 = jax.block_until_ready(
        mlp_layer_forward(x1, w1, b1, g1, be1, short_cut=True, tile_k=128))
    y1_ref = _reference(x1, w1, b1, g1, be1, short_cut=True)
    assert y1.shape == (B, out_f)
    assert jnp.allclose(y1, y1_ref, atol=1e-2, rtol=1e-2), "mismatch vs reference (shortcut)"

    # Case 2: in != out -> no residual path wired (no residual DMA at all).
    in_f2, out_f2 = 384, 256
    x2 = jax.random.normal(k3, (B, in_f2), dtype=jnp.float32)
    w2, b2, g2_, be2 = make_params(k2, in_f2, out_f2)
    y2 = jax.block_until_ready(
        mlp_layer_forward(x2, w2, b2, g2_, be2, short_cut=True))
    y2_ref = _reference(x2, w2, b2, g2_, be2, short_cut=True)
    assert y2.shape == (B, out_f2)
    assert jnp.allclose(y2, y2_ref, atol=1e-2, rtol=1e-2), "mismatch vs reference (no shortcut)"

    print("KERNEL_OK")
</pallas_src>

<mosaic_0001>
module attributes {stable_mosaic.version = 11 : i64} {
  func.func @_mlp_layer_kernel(%arg0: i32, %arg1: i32, %arg2: memref<8x128xf32, #tpu.memory_space<vmem>>, %arg3: memref<128x128xf32, #tpu.memory_space<vmem>>, %arg4: memref<1x128xf32, #tpu.memory_space<vmem>>, %arg5: memref<1x128xf32, #tpu.memory_space<vmem>>, %arg6: memref<8x128xf32, #tpu.memory_space<vmem>>, %arg7: memref<8x128xf32, #tpu.memory_space<vmem>>, %arg8: memref<8x128xf32, #tpu.memory_space<vmem>>) attributes {dimension_semantics = [#tpu.dimension_semantics<parallel>, #tpu.dimension_semantics<arbitrary>], iteration_bounds = array<i64: 2, 2>, scalar_prefetch = 0 : i64, scratch_operands = 1 : i64, tpu.core_type = #tpu.core_type<tc>, window_params = [{transform_indices = @transform_0, window_bounds = array<i64: 8, 128>}, {transform_indices = @transform_1, window_bounds = array<i64: 128, 128>}, {transform_indices = @transform_2, window_bounds = array<i64: 1, 128>}, {transform_indices = @transform_3, window_bounds = array<i64: 1, 128>}, {transform_indices = @transform_4, window_bounds = array<i64: 8, 128>}, {transform_indices = @transform_5, window_bounds = array<i64: 8, 128>}]} {
    %c0_i32 = arith.constant 0 : i32
    %0 = arith.cmpi eq, %arg1, %c0_i32 : i32
    %1 = arith.extui %0 : i1 to i32
    %c0_i32_0 = arith.constant 0 : i32
    %2 = arith.cmpi ne, %1, %c0_i32_0 : i32
    scf.if %2 {
      %cst_9 = arith.constant 0.000000e+00 : f32
      %12 = vector.broadcast %cst_9 : f32 to vector<8x128xf32>
      %c0_10 = arith.constant 0 : index
      %c0_11 = arith.constant 0 : index
      %13 = vector.load %arg8[%c0_10, %c0_11] : memref<8x128xf32, #tpu.memory_space<vmem>>, vector<8x128xf32>
      tpu.vector_store %arg8[%c0_10, %c0_11], %12 {strides = array<i32>} : memref<8x128xf32, #tpu.memory_space<vmem>>, vector<8x128xf32>,
    } else {
    }
    %c0 = arith.constant 0 : index
    %c0_1 = arith.constant 0 : index
    %3 = vector.load %arg8[%c0, %c0_1] : memref<8x128xf32, #tpu.memory_space<vmem>>, vector<8x128xf32>
    %c0_2 = arith.constant 0 : index
    %c0_3 = arith.constant 0 : index
    %4 = vector.load %arg2[%c0_2, %c0_3] : memref<8x128xf32, #tpu.memory_space<vmem>>, vector<8x128xf32>
    %c0_4 = arith.constant 0 : index
    %c0_5 = arith.constant 0 : index
    %5 = vector.load %arg3[%c0_4, %c0_5] : memref<128x128xf32, #tpu.memory_space<vmem>>, vector<128x128xf32>
    %cst = arith.constant dense<0.000000e+00> : vector<8x128xf32>
    %6 = tpu.matmul %4, %5, %cst {dimension_numbers = #tpu.dot_dimension_numbers<[1], [1], [0], [0], [0, 0, 1, 0], [], []>} : vector<8x128xf32>, vector<128x128xf32>, vector<8x128xf32> -> vector<8x128xf32>
    %7 = arith.addf %3, %6 : vector<8x128xf32>
    %c0_6 = arith.constant 0 : index
    %c0_7 = arith.constant 0 : index
    %8 = vector.load %arg8[%c0_6, %c0_7] : memref<8x128xf32, #tpu.memory_space<vmem>>, vector<8x128xf32>
    tpu.vector_store %arg8[%c0_6, %c0_7], %7 {strides = array<i32>} : memref<8x128xf32, #tpu.memory_space<vmem>>, vector<8x128xf32>,
    %c1_i32 = arith.constant 1 : i32
    %9 = arith.cmpi eq, %arg1, %c1_i32 : i32
    %10 = arith.extui %9 : i1 to i32
    %c0_i32_8 = arith.constant 0 : i32
    %11 = arith.cmpi ne, %10, %c0_i32_8 : i32
    scf.if %11 {
      %c0_9 = arith.constant 0 : index
      %c0_10 = arith.constant 0 : index
      %12 = vector.load %arg8[%c0_9, %c0_10] : memref<8x128xf32, #tpu.memory_space<vmem>>, vector<8x128xf32>
      %cst_11 = arith.constant dense<0.000000e+00> : vector<128xf32>
      %13 = vector.multi_reduction <add>, %12, %cst_11 [0] : vector<8x128xf32> to vector<128xf32>
      %14 = vector.shape_cast %13 : vector<128xf32> to vector<1x128xf32>
      %cst_12 = arith.constant 1.250000e-01 : f32
      %15 = vector.broadcast %cst_12 : f32 to vector<1x128xf32>
      %16 = arith.mulf %14, %15 : vector<1x128xf32>
      %17 = arith.mulf %12, %12 : vector<8x128xf32>
      %cst_13 = arith.constant dense<0.000000e+00> : vector<128xf32>
      %18 = vector.multi_reduction <add>, %17, %cst_13 [0] : vector<8x128xf32> to vector<128xf32>
      %19 = vector.shape_cast %18 : vector<128xf32> to vector<1x128xf32>
      %cst_14 = arith.constant 1.250000e-01 : f32
      %20 = vector.broadcast %cst_14 : f32 to vector<1x128xf32>
      %21 = arith.mulf %19, %20 : vector<1x128xf32>
      %22 = arith.mulf %16, %16 : vector<1x128xf32>
      %23 = arith.subf %21, %22 : vector<1x128xf32>
      %cst_15 = arith.constant 0.000000e+00 : f32
      %24 = vector.broadcast %cst_15 : f32 to vector<1x128xf32>
      %25 = arith.maximumf %23, %24 : vector<1x128xf32>
      %26 = vector.broadcast %16 : vector<1x128xf32> to vector<8x128xf32>
      %27 = arith.subf %12, %26 : vector<8x128xf32>
      %cst_16 = arith.constant 9.99999974E-6 : f32
      %28 = vector.broadcast %cst_16 : f32 to vector<1x128xf32>
      %29 = arith.addf %25, %28 : vector<1x128xf32>
      %30 = math.rsqrt %29 : vector<1x128xf32>
      %31 = vector.broadcast %30 : vector<1x128xf32> to vector<8x128xf32>
      %32 = arith.mulf %27, %31 : vector<8x128xf32>
      %c0_17 = arith.constant 0 : index
      %c0_18 = arith.constant 0 : index
      %33 = vector.load %arg4[%c0_17, %c0_18] : memref<1x128xf32, #tpu.memory_space<vmem>>, vector<1x128xf32>
      %34 = vector.broadcast %33 : vector<1x128xf32> to vector<8x128xf32>
      %35 = arith.mulf %32, %34 : vector<8x128xf32>
      %c0_19 = arith.constant 0 : index
      %c0_20 = arith.constant 0 : index
      %36 = vector.load %arg5[%c0_19, %c0_20] : memref<1x128xf32, #tpu.memory_space<vmem>>, vector<1x128xf32>
      %37 = vector.broadcast %36 : vector<1x128xf32> to vector<8x128xf32>
      %38 = arith.addf %35, %37 : vector<8x128xf32>
      %cst_21 = arith.constant 0.000000e+00 : f32
      %39 = vector.broadcast %cst_21 : f32 to vector<8x128xf32>
      %40 = arith.maximumf %38, %39 : vector<8x128xf32>
      %c0_22 = arith.constant 0 : index
      %c0_23 = arith.constant 0 : index
      %41 = vector.load %arg6[%c0_22, %c0_23] : memref<8x128xf32, #tpu.memory_space<vmem>>, vector<8x128xf32>
      %42 = arith.addf %40, %41 : vector<8x128xf32>
      %c0_24 = arith.constant 0 : index
      %c0_25 = arith.constant 0 : index
      %43 = vector.load %arg7[%c0_24, %c0_25] : memref<8x128xf32, #tpu.memory_space<vmem>>, vector<8x128xf32>
      tpu.vector_store %arg7[%c0_24, %c0_25], %42 {strides = array<i32>} : memref<8x128xf32, #tpu.memory_space<vmem>>, vector<8x128xf32>,
    } else {
    }
    return
  }
  func.func @transform_0(%arg0: i32, %arg1: i32) -> (i32, i32) {
    %c0_i32 = arith.constant 0 : i32
    %c0_i32_0 = arith.constant 0 : i32
    return %c0_i32, %arg1 : i32, i32
  }
  func.func @transform_1(%arg0: i32, %arg1: i32) -> (i32, i32) {
    %c0_i32 = arith.constant 0 : i32
    return %arg0, %arg1 : i32, i32
  }
  func.func @transform_2(%arg0: i32, %arg1: i32) -> (i32, i32) {
    %c0_i32 = arith.constant 0 : i32
    %c0_i32_0 = arith.constant 0 : i32
    return %c0_i32, %arg0 : i32, i32
  }
  func.func @transform_3(%arg0: i32, %arg1: i32) -> (i32, i32) {
    %c0_i32 = arith.constant 0 : i32
    %c0_i32_0 = arith.constant 0 : i32
    return %c0_i32, %arg0 : i32, i32
  }
  func.func @transform_4(%arg0: i32, %arg1: i32) -> (i32, i32) {
    %c0_i32 = arith.constant 0 : i32
    %c0_i32_0 = arith.constant 0 : i32
    return %c0_i32, %arg0 : i32, i32
  }
  func.func @transform_5(%arg0: i32, %arg1: i32) -> (i32, i32) {
    %c0_i32 = arith.constant 0 : i32
    %c0_i32_0 = arith.constant 0 : i32
    return %c0_i32, %arg0 : i32, i32
  }
}

</mosaic_0001>

<llo_original>
// kernel: tpu_custom_call.1
$region0: #{tpu_custom_call.1}
  #allocation0 [shape = 'u32[]', space=smem, size = 0x4, offset = 0x4, fixed_abs, tag = 'smem constant byte address 0x4 - core index']
  #allocation1 [shape = 'u32[144,128]{1,0:T(1,128)}', space=vmem, size = 0x12000, scoped, tag = 'internal scratch']
  #allocation2 [shape = 'f32[8,128]{1,0:T(8,128)}', space=vmem, size = 0x1000, scoped, tag = 'scratch operand']
  %s0 = inlined_call_operand.hbm [shape: f32[8,256], index: 0, kind: input, shape index: {}]
  %s1 = inlined_call_operand.hbm [shape: f32[256,256], index: 1, kind: input, shape index: {}]
  %s2 = inlined_call_operand.vmem [shape: f32[1,256], index: 2, kind: input, shape index: {}]
  %s3 = inlined_call_operand.vmem [shape: f32[1,256], index: 3, kind: input, shape index: {}]
  %s4 = inlined_call_operand.hbm [shape: f32[8,256], index: 4, kind: input, shape index: {}]
  %s5 = inlined_call_operand.hbm [shape: f32[8,256], index: 5, kind: output, shape index: {}]
  %s6 = sld [smem:[#allocation0]]
  $region73: #{tpu_custom_call.1} parent=0
    _
  %s8 = ssub.s32 1, %s6
  %s9 = scalar_select 0, %s8, %s6
  $region1: #{tpu_custom_call.1} parent=0
    #allocation3 [shape = 'u8[8192]{0}', space=vmem, size = 0x2000, scoped, tag = 'input window, operand 0']
    #allocation4 [shape = 's32[2]{0}', space=sflag, size = 0x8, scoped, tag = 'scoped memory for tpu_custom_call.1']
    #allocation5 [shape = 's32[2]{0}', space=sflag, size = 0x8, scoped, tag = 'scoped memory for tpu_custom_call.1']
    #allocation6 [shape = 'u8[131072]{0}', space=vmem, size = 0x20000, scoped, tag = 'input window, operand 1']
    #allocation7 [shape = 's32[2]{0}', space=sflag, size = 0x8, scoped, tag = 'scoped memory for tpu_custom_call.1']
    #allocation8 [shape = 'u8[8192]{0}', space=vmem, size = 0x2000, scoped, tag = 'input window, operand 4']
    #allocation9 [shape = 'u8[8192]{0}', space=vmem, size = 0x2000, scoped, tag = 'output window, operand 0']
    %10 = vsyncpa [#allocation4], 0
    %s11 = scalar_lea.sflag [#allocation4], 1
    %12 = vsyncpa %s11, 0
    %13 = vsyncpa [#allocation7], 0
    %s14 = scalar_lea.sflag [#allocation7], 1
    %15 = vsyncpa %s14, 0
    %16 = vsyncpa [#allocation5], 0
    %s17 = scalar_lea.sflag [#allocation5], 1
    %18 = vsyncpa %s17, 0
    loop: start=0, step=1, limit=6
    $region2: #{tpu_custom_call.1} parent=1 // loop_pre_header
      _
    $region3: #{tpu_custom_call.1} parent=1 // loop_header
      %s20 = sphi 0, %s24
      %p21 = scmp.ge.s32.totalorder %s20, 6
      %s27 = sphi 0, %s39
      %s28 = sphi 0, %s35
      %s29 = sphi 0, %s27
      %s30 = sphi 0, %s28
      %s31 = sphi 0, %s29
      %s32 = sphi 0, %s30
      %s42 = sphi 0, %s44
      %s45 = sphi 0, %s42
      %s46 = sphi 0, %s45
      %s62 = sphi 0, %s46
      %s70 = sphi 0, %s72
      %s73 = sphi 0, %s70
      %s74 = sphi 0, %s73
      %s90 = sphi 0, %s74
      %s96 = sphi 0, %s98
      %s99 = sphi 0, %s96
      %s100 = sphi 0, %s99
      %s116 = sphi 0, %s100
      %s122 = sphi 0, %s124
      %s125 = sphi 0, %s122
      %s126 = sphi 0, %s125
      %s142 = sphi 0, %s126
      %s148 = sphi 0, %s150
      %s151 = sphi 0, %s148
      %s152 = sphi 0, %s151
      %s168 = sphi 0, %s152
      %s174 = sphi 0, %s176
      %s177 = sphi 0, %s174
      %s178 = sphi 0, %s177
      %s194 = sphi 0, %s178
    $region4: #{tpu_custom_call.1} parent=1 // loop_header_branch
      %23 = sbr.rel (%p21) target = $region8
    $region5: #{tpu_custom_call.1} parent=1 // loop_body
      %s25 = ssub.s32 %s20, 1
      %s26 = ssub.s32 %s20, 2
      %s33 = sadd.s32 1, %s28
      %p34 = scmp.ge.s32.totalorder %s33, 2
      %s35 = scalar_select %p34, 0, %s33
      %s36 = sadd.s32 1, %s27
      %s37 = scalar_select %p34, %s36, %s27
      %p38 = scmp.ge.s32.totalorder %s37, 2
      %s39 = scalar_select %p38, 0, %s37
      %s40 = ssub.s32 %s28, %s35
      %p41 = scmp.eq.s32.totalorder %s40, 0
      %s43 = sadd.s32 %s42, 1
      %s44 = scalar_select %p41, %s42, %s43
      %p47 = pneg %p41
      %p48 = scmp.eq.s32.totalorder %s20, 3
      %p49 = por %p47, %p48
      %p50 = scmp.ne.s32.totalorder %s42, %s45
      %p51 = scmp.eq.s32.totalorder %s20, 0
      %p52 = por %p50, %p51
      %p53 = scmp.ne.s32.totalorder %s42, %s45
      %p54 = scmp.eq.s32.totalorder %s25, 3
      %p55 = por %p53, %p54
      %p56 = scmp.ne.s32.totalorder %s45, %s46
      %p57 = scmp.eq.s32.totalorder %s25, 0
      %p58 = por %p56, %p57
      %p59 = scmp.ne.s32.totalorder %s45, %s46
      %p60 = scmp.eq.s32.totalorder %s26, 3
      %p61 = por %p59, %p60
      %p63 = scmp.ne.s32.totalorder %s46, %s62
      %p64 = scmp.eq.s32.totalorder %s26, 0
      %p65 = por %p63, %p64
      %s66 = ssub.s32 %s27, %s39
      %s67 = ssub.s32 %s28, %s35
      %s68 = sor.u32 %s66, %s67
      %p69 = scmp.eq.s32.totalorder %s68, 0
      %s71 = sadd.s32 %s70, 1
      %s72 = scalar_select %p69, %s70, %s71
      %p75 = pneg %p69
      %p76 = scmp.eq.s32.totalorder %s20, 3
      %p77 = por %p75, %p76
      %p78 = scmp.ne.s32.totalorder %s70, %s73
      %p79 = scmp.eq.s32.totalorder %s20, 0
      %p80 = por %p78, %p79
      %p81 = scmp.ne.s32.totalorder %s70, %s73
      %p82 = scmp.eq.s32.totalorder %s25, 3
      %p83 = por %p81, %p82
      %p84 = scmp.ne.s32.totalorder %s73, %s74
      %p85 = scmp.eq.s32.totalorder %s25, 0
      %p86 = por %p84, %p85
      %p87 = scmp.ne.s32.totalorder %s73, %s74
      %p88 = scmp.eq.s32.totalorder %s26, 3
      %p89 = por %p87, %p88
      %p91 = scmp.ne.s32.totalorder %s74, %s90
      %p92 = scmp.eq.s32.totalorder %s26, 0
      %p93 = por %p91, %p92
      %s94 = ssub.s32 %s27, %s39
      %p95 = scmp.eq.s32.totalorder %s94, 0
      %s97 = sadd.s32 %s96, 1
      %s98 = scalar_select %p95, %s96, %s97
      %p101 = pneg %p95
      %p102 = scmp.eq.s32.totalorder %s20, 3
      %p103 = por %p101, %p102
      %p104 = scmp.ne.s32.totalorder %s96, %s99
      %p105 = scmp.eq.s32.totalorder %s20, 0
      %p106 = por %p104, %p105
      %p107 = scmp.ne.s32.totalorder %s96, %s99
      %p108 = scmp.eq.s32.totalorder %s25, 3
      %p109 = por %p107, %p108
      %p110 = scmp.ne.s32.totalorder %s99, %s100
      %p111 = scmp.eq.s32.totalorder %s25, 0
      %p112 = por %p110, %p111
      %p113 = scmp.ne.s32.totalorder %s99, %s100
      %p114 = scmp.eq.s32.totalorder %s26, 3
      %p115 = por %p113, %p114
      %p117 = scmp.ne.s32.totalorder %s100, %s116
      %p118 = scmp.eq.s32.totalorder %s26, 0
      %p119 = por %p117, %p118
      %s120 = ssub.s32 %s27, %s39
      %p121 = scmp.eq.s32.totalorder %s120, 0
      %s123 = sadd.s32 %s122, 1
      %s124 = scalar_select %p121, %s122, %s123
      %p127 = pneg %p121
      %p128 = scmp.eq.s32.totalorder %s20, 3
      %p129 = por %p127, %p128
      %p130 = scmp.ne.s32.totalorder %s122, %s125
      %p131 = scmp.eq.s32.totalorder %s20, 0
      %p132 = por %p130, %p131
      %p133 = scmp.ne.s32.totalorder %s122, %s125
      %p134 = scmp.eq.s32.totalorder %s25, 3
      %p135 = por %p133, %p134
      %p136 = scmp.ne.s32.totalorder %s125, %s126
      %p137 = scmp.eq.s32.totalorder %s25, 0
      %p138 = por %p136, %p137
      %p139 = scmp.ne.s32.totalorder %s125, %s126
      %p140 = scmp.eq.s32.totalorder %s26, 3
      %p141 = por %p139, %p140
      %p143 = scmp.ne.s32.totalorder %s126, %s142
      %p144 = scmp.eq.s32.totalorder %s26, 0
      %p145 = por %p143, %p144
      %s146 = ssub.s32 %s27, %s39
      %p147 = scmp.eq.s32.totalorder %s146, 0
      %s149 = sadd.s32 %s148, 1
      %s150 = scalar_select %p147, %s148, %s149
      %p153 = pneg %p147
      %p154 = scmp.eq.s32.totalorder %s20, 3
      %p155 = por %p153, %p154
      %p156 = scmp.ne.s32.totalorder %s148, %s151
      %p157 = scmp.eq.s32.totalorder %s20, 0
      %p158 = por %p156, %p157
      %p159 = scmp.ne.s32.totalorder %s148, %s151
      %p160 = scmp.eq.s32.totalorder %s25, 3
      %p161 = por %p159, %p160
      %p162 = scmp.ne.s32.totalorder %s151, %s152
      %p163 = scmp.eq.s32.totalorder %s25, 0
      %p164 = por %p162, %p163
      %p165 = scmp.ne.s32.totalorder %s151, %s152
      %p166 = scmp.eq.s32.totalorder %s26, 3
      %p167 = por %p165, %p166
      %p169 = scmp.ne.s32.totalorder %s152, %s168
      %p170 = scmp.eq.s32.totalorder %s26, 0
      %p171 = por %p169, %p170
      %s172 = ssub.s32 %s27, %s39
      %p173 = scmp.eq.s32.totalorder %s172, 0
      %s175 = sadd.s32 %s174, 1
      %s176 = scalar_select %p173, %s174, %s175
      %p179 = pneg %p173
      %p180 = scmp.eq.s32.totalorder %s20, 3
      %p181 = por %p179, %p180
      %p182 = scmp.ne.s32.totalorder %s174, %s177
      %p183 = scmp.eq.s32.totalorder %s20, 0
      %p184 = por %p182, %p183
      %p185 = scmp.ne.s32.totalorder %s174, %s177
      %p186 = scmp.eq.s32.totalorder %s25, 3
      %p187 = por %p185, %p186
      %p188 = scmp.ne.s32.totalorder %s177, %s178
      %p189 = scmp.eq.s32.totalorder %s25, 0
      %p190 = por %p188, %p189
      %p191 = scmp.ne.s32.totalorder %s177, %s178
      %p192 = scmp.eq.s32.totalorder %s26, 3
      %p193 = por %p191, %p192
      %p195 = scmp.ne.s32.totalorder %s178, %s194
      %p196 = scmp.eq.s32.totalorder %s26, 0
      %p197 = por %p195, %p196
      %p198 = scmp.le.s32.totalorder 1, %s20
      %p199 = scmp.lt.s32.totalorder %s20, 5
      %p200 = pnand %p198, %p199
      %p201 = pneg %p200
      // Predicated region
      $region9: #{tpu_custom_call.1} parent=5 // pred_check
        _
      $region10: #{tpu_custom_call.1} parent=5 // pred_check_branch
        %203 = sbr.rel (%p200) target = $region12
      $region11: #{tpu_custom_call.1} parent=5 // pred_region
        %s204 = ssub.s32 %s20, 1
      $region12: #{tpu_custom_call.1} parent=5 // pred_fallthru
        _
      %p205 = scmp.lt.s32.totalorder %s20, 4
      // Predicated region
      $region13: #{tpu_custom_call.1} parent=5 // pred_check
        %p206 = pneg %p205
      $region14: #{tpu_custom_call.1} parent=5 // pred_check_branch
        %208 = sbr.rel (%p206) target = $region16
      $region15: #{tpu_custom_call.1} parent=5 // pred_region
        // Predicated region
        $region17: #{tpu_custom_call.1} parent=15 // pred_check
          %p209 = pneg %p52
        $region18: #{tpu_custom_call.1} parent=15 // pred_check_branch
          %211 = sbr.rel (%p209) target = $region20
        $region19: #{tpu_custom_call.1} parent=15 // pred_region
          %s212 = sand.u32 %s42, 1
          %s213 = scalar_lea.sflag [#allocation4], %s212
          %s214 = sand.u32 %s42, 1
          %s215 = smul.addr %s214, 8
          %s216 = scalar_lea.vmem [#allocation3], %s215
          %s218 = ssub.s32 128, 128
          %219 = vsyncadd %s213, %s218
          %s220 = smul.addr %s28, 128
          %s221 = scalar_lea.hbm %s0, %s220
          %s223 = sshll.u32 %s216, 4
          %s224 = int_to_ptr.vmem [resolvable:$true] %s223
          %226 = dma.hbm_to_vmem [thread:$0]  %s221, 128, %s224, %s213
        $region20: #{tpu_custom_call.1} parent=15 // pred_fallthru
          _
        // Predicated region
        $region21: #{tpu_custom_call.1} parent=15 // pred_check
          %p227 = pneg %p80
        $region22: #{tpu_custom_call.1} parent=15 // pred_check_branch
          %229 = sbr.rel (%p227) target = $region24
        $region23: #{tpu_custom_call.1} parent=15 // pred_region
          %s230 = sand.u32 %s20, 1
          %s231 = scalar_lea.sflag [#allocation7], %s230
          %s232 = sand.u32 %s70, 1
          %s233 = smul.addr %s232, 128
          %s234 = scalar_lea.vmem [#allocation6], %s233
          %s235 = smul.u32 16, %s27
          %s237 = ssub.s32 2048, 2048
          %238 = vsyncadd %s231, %s237
          %s239 = smul.addr %s235, 2
          %s240 = sadd.s32 %s28, %s239
          %s241 = smul.addr %s240, 128
          %s242 = scalar_lea.hbm %s1, %s241
          %s243 = sshll.u32 %s234, 4
          %s244 = int_to_ptr.vmem [resolvable:$true] %s243
          %249 = dma.hbm_to_vmem [thread:$0]  %s242, 2048, %s244, %s231, 256, 128, 8
        $region24: #{tpu_custom_call.1} parent=15 // pred_fallthru
          _
        // Predicated region
        $region25: #{tpu_custom_call.1} parent=15 // pred_check
          %p250 = pneg %p106
        $region26: #{tpu_custom_call.1} parent=15 // pred_check_branch
          %252 = sbr.rel (%p250) target = $region28
        $region27: #{tpu_custom_call.1} parent=15 // pred_region
          %p253 = scmp.lt.s32.totalorder %s27, 1
          %s254 = scalar_select %p253, %s27, 1
          %s255 = scalar_lea.vmem %s2, %s254
        $region28: #{tpu_custom_call.1} parent=15 // pred_fallthru
          _
        // Predicated region
        $region29: #{tpu_custom_call.1} parent=15 // pred_check
          %p256 = pneg %p132
        $region30: #{tpu_custom_call.1} parent=15 // pred_check_branch
          %258 = sbr.rel (%p256) target = $region32
        $region31: #{tpu_custom_call.1} parent=15 // pred_region
          %p259 = scmp.lt.s32.totalorder %s27, 1
          %s260 = scalar_select %p259, %s27, 1
          %s261 = scalar_lea.vmem %s3, %s260
        $region32: #{tpu_custom_call.1} parent=15 // pred_fallthru
          _
        // Predicated region
        $region33: #{tpu_custom_call.1} parent=15 // pred_check
          %p262 = pneg %p158
        $region34: #{tpu_custom_call.1} parent=15 // pred_check_branch
          %264 = sbr.rel (%p262) target = $region36
        $region35: #{tpu_custom_call.1} parent=15 // pred_region
          %s265 = sand.u32 %s20, 1
          %s266 = scalar_lea.sflag [#allocation7], %s265
          %s267 = sand.u32 %s148, 1
          %s268 = smul.addr %s267, 8
          %s269 = scalar_lea.vmem [#allocation8], %s268
          %s271 = ssub.s32 128, 128
          %272 = vsyncadd %s266, %s271
          %s273 = smul.addr %s27, 128
          %s274 = scalar_lea.hbm %s4, %s273
          %s276 = sshll.u32 %s269, 4
          %s277 = int_to_ptr.vmem [resolvable:$true] %s276
          %279 = dma.hbm_to_vmem [thread:$0]  %s274, 128, %s277, %s266
        $region36: #{tpu_custom_call.1} parent=15 // pred_fallthru
          _
      $region16: #{tpu_custom_call.1} parent=5 // pred_fallthru
        _
      %p280 = scmp.le.s32.totalorder 1, %s20
      %p281 = scmp.lt.s32.totalorder %s20, 5
      %p282 = pnand %p280, %p281
      %p283 = pneg %p282
      // Predicated region
      $region37: #{tpu_custom_call.1} parent=5 // pred_check
        _
      $region38: #{tpu_custom_call.1} parent=5 // pred_check_branch
        %285 = sbr.rel (%p282) target = $region40
      $region39: #{tpu_custom_call.1} parent=5 // pred_region
        %s286 = ssub.s32 %s20, 1
        %s287 = sand.u32 %s45, 1
        %s288 = scalar_lea.sflag [#allocation4], %s287
        %s289 = sand.u32 %s45, 1
        %s290 = smul.addr %s289, 8
        %s291 = scalar_lea.vmem [#allocation3], %s290
        // Predicated region
        $region41: #{tpu_custom_call.1} parent=39 // pred_check
          %p292 = pneg %p58
        $region42: #{tpu_custom_call.1} parent=39 // pred_check_branch
          %294 = sbr.rel (%p292) target = $region44
        $region43: #{tpu_custom_call.1} parent=39 // pred_region
          %295 = dma.done %s288, 128
        $region44: #{tpu_custom_call.1} parent=39 // pred_fallthru
          _
        %s296 = sand.u32 %s25, 1
        %s297 = scalar_lea.sflag [#allocation7], %s296
        %s298 = sand.u32 %s73, 1
        %s299 = smul.addr %s298, 128
        %s300 = scalar_lea.vmem [#allocation6], %s299
        // Predicated region
        $region45: #{tpu_custom_call.1} parent=39 // pred_check
          %p301 = pneg %p86
        $region46: #{tpu_custom_call.1} parent=39 // pred_check_branch
          %303 = sbr.rel (%p301) target = $region48
        $region47: #{tpu_custom_call.1} parent=39 // pred_region
          %304 = dma.done %s297, 2048
        $region48: #{tpu_custom_call.1} parent=39 // pred_fallthru
          _
        %s305 = sand.u32 %s25, 1
        %s306 = scalar_lea.sflag [#allocation7], %s305
        %s307 = sand.u32 %s151, 1
        %s308 = smul.addr %s307, 8
        %s309 = scalar_lea.vmem [#allocation8], %s308
        // Predicated region
        $region49: #{tpu_custom_call.1} parent=39 // pred_check
          %p310 = pneg %p164
        $region50: #{tpu_custom_call.1} parent=39 // pred_check_branch
          %312 = sbr.rel (%p310) target = $region52
        $region51: #{tpu_custom_call.1} parent=39 // pred_region
          %313 = dma.done %s306, 128
        $region52: #{tpu_custom_call.1} parent=39 // pred_fallthru
          _
        %s314 = sand.u32 %s45, 1
        %s315 = scalar_lea.sflag [#allocation4], %s314
        %s316 = sand.u32 %s45, 1
        %s317 = smul.addr %s316, 8
        %s318 = scalar_lea.vmem [#allocation3], %s317
        %p319 = pneg %p58
        %p320 = pneg %p55
        %s321 = sand.u32 %s25, 1
        %s322 = scalar_lea.sflag [#allocation7], %s321
        %s323 = sand.u32 %s73, 1
        %s324 = smul.addr %s323, 128
        %s325 = scalar_lea.vmem [#allocation6], %s324
        %p326 = pneg %p86
        %p327 = pneg %p83
        %p328 = scmp.lt.s32.totalorder %s29, 1
        %s329 = scalar_select %p328, %s29, 1
        %s330 = scalar_lea.vmem %s2, %s329
        %p331 = pneg %p112
        %p332 = pneg %p109
        %p333 = scmp.lt.s32.totalorder %s29, 1
        %s334 = scalar_select %p333, %s29, 1
        %s335 = scalar_lea.vmem %s3, %s334
        %p336 = pneg %p138
        %p337 = pneg %p135
        %s338 = sand.u32 %s25, 1
        %s339 = scalar_lea.sflag [#allocation7], %s338
        %s340 = sand.u32 %s151, 1
        %s341 = smul.addr %s340, 8
        %s342 = scalar_lea.vmem [#allocation8], %s341
        %p343 = pneg %p164
        %p344 = pneg %p161
        %p345 = pneg %p190
        %p346 = pneg %p187
        %s347 = sand.u32 %s177, 1
        %s348 = scalar_lea.sflag [#allocation5], %s347
        %s349 = sand.u32 %s177, 1
        %s350 = smul.addr %s349, 8
        %s351 = scalar_lea.vmem [#allocation9], %s350
        %s352 = smul.u32 16, %s29
        %p353 = scmp.lt.s32.totalorder %s29, 1
        %s354 = scalar_select %p353, %s29, 1
        %s355 = scalar_lea.vmem %s2, %s354
        %p356 = scmp.lt.s32.totalorder %s29, 1
        %s357 = scalar_select %p356, %s29, 1
        %s358 = scalar_lea.vmem %s3, %s357
        %p359 = scmp.eq.s32.totalorder %s30, 0
        // Predicated region
        $region53: #{tpu_custom_call.1} parent=39 // pred_check
          %p360 = pneg %p359
        $region54: #{tpu_custom_call.1} parent=39 // pred_check_branch
          %362 = sbr.rel (%p360) target = $region56
        $region55: #{tpu_custom_call.1} parent=39 // pred_region
          %363 = vst [vmem:[#allocation2] sm:$0xff] 0.0
        $region56: #{tpu_custom_call.1} parent=39 // pred_fallthru
          _
        %v364 = vld [vmem:[#allocation2] sm:$0xff]
        %v365 = vld [vmem:[%s291] sm:$0xff]
        %v366 = vld [vmem:[%s300] sm:$0xff]
        %v367 = vld [vmem:[%s300 + $0x8] sm:$0xff]
        %v368 = vld [vmem:[%s300 + $0x10] sm:$0xff]
        %v369 = vld [vmem:[%s300 + $0x18] sm:$0xff]
        %v370 = vld [vmem:[%s300 + $0x20] sm:$0xff]
        %v371 = vld [vmem:[%s300 + $0x28] sm:$0xff]
        %v372 = vld [vmem:[%s300 + $0x30] sm:$0xff]
        %v373 = vld [vmem:[%s300 + $0x38] sm:$0xff]
        %v374 = vld [vmem:[%s300 + $0x40] sm:$0xff]
        %v375 = vld [vmem:[%s300 + $0x48] sm:$0xff]
        %v376 = vld [vmem:[%s300 + $0x50] sm:$0xff]
        %v377 = vld [vmem:[%s300 + $0x58] sm:$0xff]
        %v378 = vld [vmem:[%s300 + $0x60] sm:$0xff]
        %v379 = vld [vmem:[%s300 + $0x68] sm:$0xff]
        %v380 = vld [vmem:[%s300 + $0x70] sm:$0xff]
        %v381 = vld [vmem:[%s300 + $0x78] sm:$0xff]
        %382 = vmatprep.subr.mxu0 0.0
        %383 = vmatpush1.xpose.msra.mxu0 %v366
        %384 = vmatprep.subr.mxu0 0.0
        %385 = vmatpush1.xpose.msra.mxu0 %v367
        %386 = vmatprep.subr.mxu0 0.0
        %387 = vmatpush1.xpose.msra.mxu0 %v368
        %388 = vmatprep.subr.mxu0 0.0
        %389 = vmatpush1.xpose.msra.mxu0 %v369
        %390 = vmatprep.subr.mxu0 0.0
        %391 = vmatpush1.xpose.msra.mxu0 %v370
        %392 = vmatprep.subr.mxu0 0.0
        %393 = vmatpush1.xpose.msra.mxu0 %v371
        %394 = vmatprep.subr.mxu0 0.0
        %395 = vmatpush1.xpose.msra.mxu0 %v372
        %396 = vmatprep.subr.mxu0 0.0
        %397 = vmatpush1.xpose.msra.mxu0 %v373
        %398 = vmatprep.subr.mxu0 0.0
        %399 = vmatpush1.xpose.msra.mxu0 %v374
        %400 = vmatprep.subr.mxu0 0.0
        %401 = vmatpush1.xpose.msra.mxu0 %v375
        %402 = vmatprep.subr.mxu0 0.0
        %403 = vmatpush1.xpose.msra.mxu0 %v376
        %404 = vmatprep.subr.mxu0 0.0
        %405 = vmatpush1.xpose.msra.mxu0 %v377
        %406 = vmatprep.subr.mxu0 0.0
        %407 = vmatpush1.xpose.msra.mxu0 %v378
        %408 = vmatprep.subr.mxu0 0.0
        %409 = vmatpush1.xpose.msra.mxu0 %v379
        %410 = vmatprep.subr.mxu0 0.0
        %411 = vmatpush1.xpose.msra.mxu0 %v380
        %412 = vmatprep.subr.mxu0 0.0
        %413 = vmatpush1.xpose.msra.mxu0 %v381
        %414 = vmatprep.subr.mxu0 0.0
        %415 = vmatpush1.xpose.msra.mxu0 0.0
        %416 = vmatprep.subr.mxu0 0.0
        %417 = vmatpush1.xpose.msra.mxu0 0.0
        %418 = vmatprep.subr.mxu0 0.0
        %419 = vmatpush1.xpose.msra.mxu0 0.0
        %420 = vmatprep.subr.mxu0 0.0
        %421 = vmatpush1.xpose.msra.mxu0 0.0
        %422 = vmatprep.subr.mxu0 0.0
        %423 = vmatpush1.xpose.msra.mxu0 0.0
        %424 = vmatprep.subr.mxu0 0.0
        %425 = vmatpush1.xpose.msra.mxu0 0.0
        %426 = vmatprep.subr.mxu0 0.0
        %427 = vmatpush1.xpose.msra.mxu0 0.0
        %428 = vmatprep.subr.mxu0 0.0
        %429 = vmatpush1.xpose.msra.mxu0 0.0
        %430 = vmatprep.subr.mxu0 0.0
        %431 = vmatpush1.xpose.msra.mxu0 0.0
        %432 = vmatprep.subr.mxu0 0.0
        %433 = vmatpush1.xpose.msra.mxu0 0.0
        %434 = vmatprep.subr.mxu0 0.0
        %435 = vmatpush1.xpose.msra.mxu0 0.0
        %436 = vmatprep.subr.mxu0 0.0
        %437 = vmatpush1.xpose.msra.mxu0 0.0
        %438 = vmatprep.subr.mxu0 0.0
        %439 = vmatpush1.xpose.msra.mxu0 0.0
        %440 = vmatprep.subr.mxu0 0.0
        %441 = vmatpush1.xpose.msra.mxu0 0.0
        %442 = vmatprep.subr.mxu0 0.0
        %443 = vmatpush1.xpose.msra.mxu0 0.0
        %444 = vmatprep.subr.mxu0 0.0
        %445 = vmatpush1.xpose.msra.mxu0 0.0
        %446 = vmatprep.mubr.f32.mxu0 0.0
        %447 = vmatmul.mubr.f32.gmra.mrb[0].mxu0 %v365
        %v448 = vpop.f32.mrb[0].mxu0
        %v449 = vadd.f32 0.0, %v448
        %v450 = vpop.f32.mrb[0].mxu0
        %451 = vdwg.mxu0
        %v452 = vadd.f32 %v364, %v449
        %453 = vst [vmem:[#allocation2] sm:$0xff] %v452
        %p454 = scmp.eq.s32.totalorder %s30, 1
        // Predicated region
        $region57: #{tpu_custom_call.1} parent=39 // pred_check
          %p455 = pneg %p454
        $region58: #{tpu_custom_call.1} parent=39 // pred_check_branch
          %457 = sbr.rel (%p455) target = $region60
        $region59: #{tpu_custom_call.1} parent=39 // pred_region
          %v458 = vld [vmem:[#allocation2] sm:$0xff]
          %v459 = vrot.slane %v458, 4
          %v460 = vadd.f32 %v458, %v459
          %v461 = vrot.slane %v460, 2
          %v462 = vadd.f32 %v460, %v461
          %v463 = vrot.slane %v462, 1
          %v464 = vadd.f32 %v462, %v463
          %v465 = vmul.f32 %v464, 0.125
          %v466 = vmul.f32 %v458, %v458
          %v467 = vrot.slane %v466, 4
          %v468 = vadd.f32 %v466, %v467
          %v469 = vrot.slane %v468, 2
          %v470 = vadd.f32 %v468, %v469
          %v471 = vrot.slane %v470, 1
          %v472 = vadd.f32 %v470, %v471
          %v473 = vmul.f32 %v472, 0.125
          %v474 = vmul.f32 %v465, %v465
          %v475 = vsub.f32 %v473, %v474
          %v476 = vmax.f32 %v475, 0.0
          %v477 = vsub.f32 %v458, %v465
          %v478 = vadd.f32 %v476, 1e-05
          %v479 = vrsqrt.pop %v478
          %v480 = vmul.f32 %v477, %v479
          %v481 = vld [vmem:[%s355] sm:$0x1]
          %v483 = vlaneseq
          %v484 = vshrl.u32 %v483, 7
          %v485 = vsub.s32 0, %v484
          %v486 = vrot.slane %v481, %v485
          %v488 = vmul.f32 %v480, %v486
          %v489 = vld [vmem:[%s358] sm:$0x1]
          %v491 = vlaneseq
          %v492 = vshrl.u32 %v491, 7
          %v493 = vsub.s32 0, %v492
          %v494 = vrot.slane %v489, %v493
          %v496 = vadd.f32 %v488, %v494
          %v497 = vmax.f32 %v496, 0.0
          %v498 = vld [vmem:[%s309] sm:$0xff]
          %v499 = vadd.f32 %v497, %v498
          %500 = vst [vmem:[%s351] sm:$0xff] %v499
        $region60: #{tpu_custom_call.1} parent=39 // pred_fallthru
          _
        %s501 = sand.u32 %s177, 1
        %s502 = scalar_lea.sflag [#allocation5], %s501
        %s503 = sand.u32 %s177, 1
        %s504 = smul.addr %s503, 8
        %s505 = scalar_lea.vmem [#allocation9], %s504
        // Predicated region
        $region61: #{tpu_custom_call.1} parent=39 // pred_check
          %p506 = pneg %p187
        $region62: #{tpu_custom_call.1} parent=39 // pred_check_branch
          %508 = sbr.rel (%p506) target = $region64
        $region63: #{tpu_custom_call.1} parent=39 // pred_region
          %s510 = ssub.s32 128, 128
          %511 = vsyncadd %s502, %s510
          %s512 = smul.addr %s29, 128
          %s513 = scalar_lea.hbm %s5, %s512
          %s515 = sshll.u32 %s505, 4
          %s516 = int_to_ptr.vmem [resolvable:$true] %s515
          %518 = dma.vmem_to_hbm [thread:$0]  %s516, 128, %s513, %s502
        $region64: #{tpu_custom_call.1} parent=39 // pred_fallthru
          _
      $region40: #{tpu_custom_call.1} parent=5 // pred_fallthru
        _
      %p519 = scmp.le.s32.totalorder 2, %s20
      // Predicated region
      $region65: #{tpu_custom_call.1} parent=5 // pred_check
        %p520 = pneg %p519
      $region66: #{tpu_custom_call.1} parent=5 // pred_check_branch
        %522 = sbr.rel (%p520) target = $region68
      $region67: #{tpu_custom_call.1} parent=5 // pred_region
        %s523 = ssub.s32 %s20, 2
        // Predicated region
        $region69: #{tpu_custom_call.1} parent=67 // pred_check
          %p524 = pneg %p193
        $region70: #{tpu_custom_call.1} parent=67 // pred_check_branch
          %526 = sbr.rel (%p524) target = $region72
        $region71: #{tpu_custom_call.1} parent=67 // pred_region
          %s527 = sand.u32 %s178, 1
          %s528 = scalar_lea.sflag [#allocation5], %s527
          %s529 = sand.u32 %s178, 1
          %s530 = smul.addr %s529, 8
          %s531 = scalar_lea.vmem [#allocation9], %s530
          %532 = dma.done %s528, 128
        $region72: #{tpu_custom_call.1} parent=67 // pred_fallthru
          _
      $region68: #{tpu_custom_call.1} parent=5 // pred_fallthru
        _
    $region6: #{tpu_custom_call.1} parent=1 // loop_footer
      %s24 = sadd.s32 1, %s20
    $region7: #{tpu_custom_call.1} parent=1 // loop_footer_branch
      %19 = sbr.rel target = $region3
    $region8: #{tpu_custom_call.1} parent=1 // loop_exit
      _
    %533 = vsyncpa [#allocation4], 1
    %s534 = scalar_lea.sflag [#allocation4], 1
    %535 = vsyncpa %s534, 1
    %536 = vsyncpa [#allocation7], 1
    %s537 = scalar_lea.sflag [#allocation7], 1
    %538 = vsyncpa %s537, 1
    %539 = vsyncpa [#allocation5], 1
    %s540 = scalar_lea.sflag [#allocation5], 1
    %541 = vsyncpa %s540, 1

</llo_original>
